<compile_context>
chip_gen: v5e
topology: v5e:2x2
jax: 0.10.0
libtpu: 0.0.40
codegen_flags: <defaults>
</compile_context>

<pallas_src>
import jax
import jax.numpy as jnp
from jax import lax
from jax.experimental import pallas as pl
from jax.experimental.pallas import tpu as pltpu


def fcn_kernel(x_ref, w_in_ref, b_in_ref, wh_ref, bh_ref, w_out_ref, b_out_ref,
               o_ref):
    """One batch tile. Activations are (features, batch_tile): batch on lanes."""
    xT = x_ref[...]                       # (N_INPUT, TB)
    w_in = w_in_ref[...]                  # (N_HIDDEN, N_INPUT)  torch (out, in)
    b_in = b_in_ref[...]                  # (N_HIDDEN, 1)

    if w_in.shape[1] == 1:
        # K == 1: a matmul would burn a full MXU pass at <1% utilization; do the
        # rank-1 product on the VPU instead: (H,1) * (1,TB) -> (H,TB).
        h = jnp.tanh(w_in * xT + b_in)
    else:
        h = jnp.tanh(jnp.dot(w_in, xT, preferred_element_type=jnp.float32) + b_in)

    # Hidden stack (N_LAYERS - 1 layers), statically unrolled — preferable at
    # this depth (2) for LLO scheduler visibility.
    # TODO(synk): switch to lax.fori_loop with dynamic wh_ref[i] indexing if the
    # depth is ever scaled past ~8 layers (vreg pressure / code size).
    mm_dtype = wh_ref.dtype               # bf16 operands if requested; acc is f32
    for i in range(wh_ref.shape[0]):
        h = jnp.tanh(
            jnp.dot(wh_ref[i], h.astype(mm_dtype),
                    preferred_element_type=jnp.float32)
            + bh_ref[i]
        )

    w_out = w_out_ref[...]                # (N_HIDDEN, N_OUTPUT) column layout
    b_out = b_out_ref[...]                # (N_OUTPUT, 1)
    if w_out.shape[1] == 1:
        # N == 1: VPU multiply + sublane (XLU) reduction instead of an MXU pass;
        # the (1, TB) result is stored as one lane-dense row.
        out = jnp.sum(h * w_out, axis=0, keepdims=True) + b_out
    else:
        out = lax.dot_general(w_out, h, (((0,), (0,)), ((), ())),
                              preferred_element_type=jnp.float32) + b_out

    o_ref[...] = out.astype(o_ref.dtype)


def _round_up(x, m):
    return ((x + m - 1) // m) * m


def fcn_forward(x, params, *, block_batch=512, matmul_dtype=jnp.float32):
    """x: (B, N_INPUT) -> (B, N_OUTPUT); same math as the torch FCN forward."""
    w_in, b_in, wh, bh, w_out_t, b_out = params
    B, n_in = x.shape
    n_hidden = w_in.shape[0]
    n_out = w_out_t.shape[1]
    n_stack = wh.shape[0]                 # N_LAYERS - 1 hidden blocks

    # Optional bf16 matmul operands (f32 accumulate) for full-rate MXU on
    # v6e/v7x; default stays f32 so the tight correctness check holds.
    wh = wh.astype(matmul_dtype)

    # Batch tile = lanes per grid step.  Keep it 128-aligned (lane width) and
    # don't over-pad tiny batches; big batches use the full block for fewer
    # grid steps (per-step overhead dominates a net this small).
    block_batch = _round_up(block_batch, 128)
    tb = min(block_batch, _round_up(B, 128))
    n_tiles = pl.cdiv(B, tb)
    b_pad = n_tiles * tb

    xT = x.T.astype(jnp.float32)          # (N_INPUT, B): batch on the lane axis
    if b_pad != B:
        xT = jnp.pad(xT, ((0, 0), (0, b_pad - B)))

    const2 = lambda i: (0, 0)
    const3 = lambda i: (0, 0, 0)

    grid_spec = pltpu.PrefetchScalarGridSpec(
        num_scalar_prefetch=0,
        grid=(n_tiles,),
        in_specs=[
            pl.BlockSpec((n_in, tb), lambda i: (0, i)),           # streamed x
            pl.BlockSpec((n_hidden, n_in), const2),               # resident W_in
            pl.BlockSpec((n_hidden, 1), const2),                  # resident b_in
            pl.BlockSpec((n_stack, n_hidden, n_hidden), const3),  # resident W_h
            pl.BlockSpec((n_stack, n_hidden, 1), const3),         # resident b_h
            pl.BlockSpec((n_hidden, n_out), const2),              # resident W_out
            pl.BlockSpec((n_out, 1), const2),                     # resident b_out
        ],
        out_specs=pl.BlockSpec((n_out, tb), lambda i: (0, i)),
    )

    # Advisory cost hint so XLA schedules other work around the custom call.
    flops_per_pt = (2 * n_hidden * n_in
                    + n_stack * 2 * n_hidden * n_hidden
                    + 2 * n_hidden * n_out)
    weight_bytes = 4 * (n_hidden * n_in + n_hidden
                        + n_stack * n_hidden * (n_hidden + 1)
                        + n_hidden * n_out + n_out)
    cost = pl.CostEstimate(
        flops=b_pad * flops_per_pt,
        transcendentals=b_pad * n_hidden * (n_stack + 1),
        bytes_accessed=4 * b_pad * (n_in + n_out) + weight_bytes,
    )

    outT = pl.pallas_call(
        fcn_kernel,
        out_shape=jax.ShapeDtypeStruct((n_out, b_pad), jnp.float32),
        grid_spec=grid_spec,
        compiler_params=pltpu.CompilerParams(
            # Batch tiles are independent -> megacore sharding on v7x.
            dimension_semantics=("parallel",),
            # Footprint here is ~1 MiB; an explicit limit keeps headroom on
            # every generation (v5e 16 MiB default scoped, v7x 64 MiB physical)
            # if TB / N_HIDDEN are scaled up.
            vmem_limit_bytes=32 * 1024 * 1024,
        ),
        cost_estimate=cost,
    )(xT, w_in, b_in, wh, bh, w_out_t, b_out)

    return outT[:, :B].T                  # back to (B, N_OUTPUT)


def init_params(key, n_input, n_output, n_hidden, n_layers):
    """torch.nn.Linear-style init U(-1/sqrt(fan_in), 1/sqrt(fan_in)).

    Layout (column/torch-friendly for the transposed kernel):
      w_in  : (n_hidden, n_input)              (torch (out, in))
      b_in  : (n_hidden, 1)
      wh    : (n_layers-1, n_hidden, n_hidden) (torch (out, in) per layer)
      bh    : (n_layers-1, n_hidden, 1)
      w_out : (n_hidden, n_output)             (transposed torch layout)
      b_out : (n_output, 1)
    """
    ks = jax.random.split(key, 6)

    def uni(k, shape, fan_in):
        bound = 1.0 / jnp.sqrt(float(fan_in))
        return jax.random.uniform(k, shape, jnp.float32, -bound, bound)

    w_in = uni(ks[0], (n_hidden, n_input), n_input)
    b_in = uni(ks[1], (n_hidden, 1), n_input)
    wh = uni(ks[2], (n_layers - 1, n_hidden, n_hidden), n_hidden)
    bh = uni(ks[3], (n_layers - 1, n_hidden, 1), n_hidden)
    w_out = uni(ks[4], (n_hidden, n_output), n_hidden)
    b_out = uni(ks[5], (n_output, 1), n_hidden)
    return (w_in, b_in, wh, bh, w_out, b_out)


def fcn_reference(x, params):
    """Pure-JAX reference; mathematically identical to torch's forward.

    The 1-wide contractions (N_INPUT=1 / N_OUTPUT=1) are written elementwise so
    the reference follows the kernel's exact-f32 path; a dot at XLA's default
    TPU matmul precision could otherwise differ at the ~1e-3 level.
    """
    w_in, b_in, wh, bh, w_out_t, b_out = params
    if w_in.shape[1] == 1:
        h = jnp.tanh(x * w_in.T + b_in.T)            # (B,1)*(1,H)
    else:
        h = jnp.tanh(x @ w_in.T + b_in.T)
    for i in range(wh.shape[0]):
        h = jnp.tanh(h @ wh[i].T + bh[i].T)
    if w_out_t.shape[1] == 1:
        return jnp.sum(h * w_out_t.T, axis=1, keepdims=True) + b_out.T
    return h @ w_out_t + b_out.T


if __name__ == "__main__":
    N_INPUT, N_OUTPUT, N_HIDDEN, N_LAYERS = 1, 1, 32, 3
    BATCH = 1024          # collocation points; 2 grid steps at TB=512

    key = jax.random.PRNGKey(0)
    k_x, k_p = jax.random.split(key)
    x = jax.random.uniform(k_x, (BATCH, N_INPUT), jnp.float32)
    params = init_params(k_p, N_INPUT, N_OUTPUT, N_HIDDEN, N_LAYERS)

    out = fcn_forward(x, params, block_batch=512)
    out = jax.block_until_ready(out)

    ref = fcn_reference(x, params)
    assert out.shape == (BATCH, N_OUTPUT)
    assert jnp.allclose(out, ref, atol=5e-5, rtol=5e-5), float(
        jnp.max(jnp.abs(out - ref)))

    # Ragged / small batch path (single 128-aligned tile with padding).
    x_small = jax.random.uniform(jax.random.PRNGKey(1), (100, N_INPUT),
                                 jnp.float32)
    out_small = jax.block_until_ready(fcn_forward(x_small, params))
    ref_small = fcn_reference(x_small, params)
    assert out_small.shape == (100, N_OUTPUT)
    assert jnp.allclose(out_small, ref_small, atol=5e-5, rtol=5e-5), float(
        jnp.max(jnp.abs(out_small - ref_small)))

    print("KERNEL_OK")
</pallas_src>

<mosaic_0001>
module attributes {stable_mosaic.version = 11 : i64} {
  func.func @fcn_kernel(%arg0: i32, %arg1: memref<1x512xf32, #tpu.memory_space<vmem>>, %arg2: memref<32x1xf32, #tpu.memory_space<vmem>>, %arg3: memref<32x1xf32, #tpu.memory_space<vmem>>, %arg4: memref<2x32x32xf32, #tpu.memory_space<vmem>>, %arg5: memref<2x32x1xf32, #tpu.memory_space<vmem>>, %arg6: memref<32x1xf32, #tpu.memory_space<vmem>>, %arg7: memref<1x1xf32, #tpu.memory_space<vmem>>, %arg8: memref<1x512xf32, #tpu.memory_space<vmem>>) attributes {dimension_semantics = [#tpu.dimension_semantics<parallel>], iteration_bounds = array<i64: 2>, scalar_prefetch = 0 : i64, scratch_operands = 0 : i64, tpu.core_type = #tpu.core_type<tc>, window_params = [{transform_indices = @transform_0, window_bounds = array<i64: 1, 512>}, {pipeline_mode = #tpu.pipeline_mode<synchronous>, transform_indices = @transform_1, window_bounds = array<i64: 32, 1>}, {pipeline_mode = #tpu.pipeline_mode<synchronous>, transform_indices = @transform_2, window_bounds = array<i64: 32, 1>}, {pipeline_mode = #tpu.pipeline_mode<synchronous>, transform_indices = @transform_3, window_bounds = array<i64: 2, 32, 32>}, {pipeline_mode = #tpu.pipeline_mode<synchronous>, transform_indices = @transform_4, window_bounds = array<i64: 2, 32, 1>}, {pipeline_mode = #tpu.pipeline_mode<synchronous>, transform_indices = @transform_5, window_bounds = array<i64: 32, 1>}, {pipeline_mode = #tpu.pipeline_mode<synchronous>, transform_indices = @transform_6, window_bounds = array<i64: 1, 1>}, {transform_indices = @transform_7, window_bounds = array<i64: 1, 512>}]} {
    %c0 = arith.constant 0 : index
    %c0_0 = arith.constant 0 : index
    %0 = vector.load %arg1[%c0, %c0_0] : memref<1x512xf32, #tpu.memory_space<vmem>>, vector<1x512xf32>
    %c0_1 = arith.constant 0 : index
    %c0_2 = arith.constant 0 : index
    %1 = vector.load %arg2[%c0_1, %c0_2] : memref<32x1xf32, #tpu.memory_space<vmem>>, vector<32x1xf32>
    %c0_3 = arith.constant 0 : index
    %c0_4 = arith.constant 0 : index
    %2 = vector.load %arg3[%c0_3, %c0_4] : memref<32x1xf32, #tpu.memory_space<vmem>>, vector<32x1xf32>
    %3 = vector.broadcast %1 : vector<32x1xf32> to vector<32x512xf32>
    %4 = vector.broadcast %0 : vector<1x512xf32> to vector<32x512xf32>
    %5 = arith.mulf %3, %4 : vector<32x512xf32>
    %6 = vector.broadcast %2 : vector<32x1xf32> to vector<32x512xf32>
    %7 = arith.addf %5, %6 : vector<32x512xf32>
    %8 = math.tanh %7 : vector<32x512xf32>
    %c0_5 = arith.constant 0 : index
    %c0_6 = arith.constant 0 : index
    %c0_7 = arith.constant 0 : index
    %9 = vector.load %arg4[%c0_5, %c0_6, %c0_7] : memref<2x32x32xf32, #tpu.memory_space<vmem>>, vector<1x32x32xf32>
    %10 = vector.shape_cast %9 : vector<1x32x32xf32> to vector<32x32xf32>
    %cst = arith.constant dense<0.000000e+00> : vector<32x512xf32>
    %11 = tpu.matmul %10, %8, %cst {dimension_numbers = #tpu.dot_dimension_numbers<[1], [0], [0], [1], [0, 0, 1, 1], [], []>} : vector<32x32xf32>, vector<32x512xf32>, vector<32x512xf32> -> vector<32x512xf32>
    %c0_8 = arith.constant 0 : index
    %c0_9 = arith.constant 0 : index
    %c0_10 = arith.constant 0 : index
    %12 = vector.load %arg5[%c0_8, %c0_9, %c0_10] : memref<2x32x1xf32, #tpu.memory_space<vmem>>, vector<1x32x1xf32>
    %13 = vector.shape_cast %12 : vector<1x32x1xf32> to vector<32x1xf32>
    %14 = vector.broadcast %13 : vector<32x1xf32> to vector<32x512xf32>
    %15 = arith.addf %11, %14 : vector<32x512xf32>
    %16 = math.tanh %15 : vector<32x512xf32>
    %c1 = arith.constant 1 : index
    %c0_11 = arith.constant 0 : index
    %c0_12 = arith.constant 0 : index
    %17 = vector.load %arg4[%c1, %c0_11, %c0_12] : memref<2x32x32xf32, #tpu.memory_space<vmem>>, vector<1x32x32xf32>
    %18 = vector.shape_cast %17 : vector<1x32x32xf32> to vector<32x32xf32>
    %cst_13 = arith.constant dense<0.000000e+00> : vector<32x512xf32>
    %19 = tpu.matmul %18, %16, %cst_13 {dimension_numbers = #tpu.dot_dimension_numbers<[1], [0], [0], [1], [0, 0, 1, 1], [], []>} : vector<32x32xf32>, vector<32x512xf32>, vector<32x512xf32> -> vector<32x512xf32>
    %c1_14 = arith.constant 1 : index
    %c0_15 = arith.constant 0 : index
    %c0_16 = arith.constant 0 : index
    %20 = vector.load %arg5[%c1_14, %c0_15, %c0_16] : memref<2x32x1xf32, #tpu.memory_space<vmem>>, vector<1x32x1xf32>
    %21 = vector.shape_cast %20 : vector<1x32x1xf32> to vector<32x1xf32>
    %22 = vector.broadcast %21 : vector<32x1xf32> to vector<32x512xf32>
    %23 = arith.addf %19, %22 : vector<32x512xf32>
    %24 = math.tanh %23 : vector<32x512xf32>
    %c0_17 = arith.constant 0 : index
    %c0_18 = arith.constant 0 : index
    %25 = vector.load %arg6[%c0_17, %c0_18] : memref<32x1xf32, #tpu.memory_space<vmem>>, vector<32x1xf32>
    %c0_19 = arith.constant 0 : index
    %c0_20 = arith.constant 0 : index
    %26 = vector.load %arg7[%c0_19, %c0_20] : memref<1x1xf32, #tpu.memory_space<vmem>>, vector<1x1xf32>
    %27 = vector.broadcast %25 : vector<32x1xf32> to vector<32x512xf32>
    %28 = arith.mulf %24, %27 : vector<32x512xf32>
    %cst_21 = arith.constant dense<0.000000e+00> : vector<512xf32>
    %29 = vector.multi_reduction <add>, %28, %cst_21 [0] : vector<32x512xf32> to vector<512xf32>
    %30 = vector.shape_cast %29 : vector<512xf32> to vector<1x512xf32>
    %31 = vector.broadcast %26 : vector<1x1xf32> to vector<1x512xf32>
    %32 = arith.addf %30, %31 : vector<1x512xf32>
    %c0_22 = arith.constant 0 : index
    %c0_23 = arith.constant 0 : index
    %33 = vector.load %arg8[%c0_22, %c0_23] : memref<1x512xf32, #tpu.memory_space<vmem>>, vector<1x512xf32>
    tpu.vector_store %arg8[%c0_22, %c0_23], %32 {strides = array<i32>} : memref<1x512xf32, #tpu.memory_space<vmem>>, vector<1x512xf32>,
    return
  }
  func.func @transform_0(%arg0: i32) -> (i32, i32) {
    %c0_i32 = arith.constant 0 : i32
    %c0_i32_0 = arith.constant 0 : i32
    return %c0_i32, %arg0 : i32, i32
  }
  func.func @transform_1(%arg0: i32) -> (i32, i32) {
    %c0_i32 = arith.constant 0 : i32
    %c0_i32_0 = arith.constant 0 : i32
    %c0_i32_1 = arith.constant 0 : i32
    return %c0_i32, %c0_i32_0 : i32, i32
  }
  func.func @transform_2(%arg0: i32) -> (i32, i32) {
    %c0_i32 = arith.constant 0 : i32
    %c0_i32_0 = arith.constant 0 : i32
    %c0_i32_1 = arith.constant 0 : i32
    return %c0_i32, %c0_i32_0 : i32, i32
  }
  func.func @transform_3(%arg0: i32) -> (i32, i32, i32) {
    %c0_i32 = arith.constant 0 : i32
    %c0_i32_0 = arith.constant 0 : i32
    %c0_i32_1 = arith.constant 0 : i32
    %c0_i32_2 = arith.constant 0 : i32
    return %c0_i32, %c0_i32_0, %c0_i32_1 : i32, i32, i32
  }
  func.func @transform_4(%arg0: i32) -> (i32, i32, i32) {
    %c0_i32 = arith.constant 0 : i32
    %c0_i32_0 = arith.constant 0 : i32
    %c0_i32_1 = arith.constant 0 : i32
    %c0_i32_2 = arith.constant 0 : i32
    return %c0_i32, %c0_i32_0, %c0_i32_1 : i32, i32, i32
  }
  func.func @transform_5(%arg0: i32) -> (i32, i32) {
    %c0_i32 = arith.constant 0 : i32
    %c0_i32_0 = arith.constant 0 : i32
    %c0_i32_1 = arith.constant 0 : i32
    return %c0_i32, %c0_i32_0 : i32, i32
  }
  func.func @transform_6(%arg0: i32) -> (i32, i32) {
    %c0_i32 = arith.constant 0 : i32
    %c0_i32_0 = arith.constant 0 : i32
    %c0_i32_1 = arith.constant 0 : i32
    return %c0_i32, %c0_i32_0 : i32, i32
  }
  func.func @transform_7(%arg0: i32) -> (i32, i32) {
    %c0_i32 = arith.constant 0 : i32
    %c0_i32_0 = arith.constant 0 : i32
    return %c0_i32, %arg0 : i32, i32
  }
}

</mosaic_0001>

<llo_original>
// kernel: tpu_custom_call.1
$region0: #{tpu_custom_call.1}
  #allocation0 [shape = 'u32[]', space=smem, size = 0x4, offset = 0x4, fixed_abs, tag = 'smem constant byte address 0x4 - core index']
  #allocation1 [shape = 'u32[72,128]{1,0:T(1,128)}', space=vmem, size = 0x9000, scoped, tag = 'internal scratch']
  #allocation2 [shape = 'f32[1,1]{1,0:T(1,128)S(1)}', space=vmem, size = 0x200, scoped, tag = 'scoped memory for tpu_custom_call.1']
  %s0 = inlined_call_operand.vmem [shape: f32[1,1024], index: 0, kind: input, shape index: {}]
  %s1 = inlined_call_operand.vmem [shape: f32[32,1], index: 1, kind: input, shape index: {}]
  %s2 = inlined_call_operand.vmem [shape: f32[32,1], index: 2, kind: input, shape index: {}]
  %s3 = inlined_call_operand.vmem [shape: f32[2,32,32], index: 3, kind: input, shape index: {}]
  %s4 = inlined_call_operand.vmem [shape: f32[2,32,1], index: 4, kind: input, shape index: {}]
  %s5 = inlined_call_operand.vmem [shape: f32[32,1], index: 5, kind: input, shape index: {}]
  %s6 = inlined_call_operand.<no memory space> [shape: f32[1,1], index: 6, kind: input, shape index: {}]
  %s7 = inlined_call_operand.hbm [shape: f32[1,1024], index: 7, kind: output, shape index: {}]
  %s8 = sld [smem:[#allocation0]]
  $region61: #{tpu_custom_call.1} parent=0
    _
  %s10 = ssub.s32 1, %s8
  %s11 = scalar_select 0, %s10, %s8
  %v12 = vstv %s6
  %13 = vst [vmem:[#allocation2] sm:$0x1] %v12
  $region1: #{tpu_custom_call.1} parent=0
    #allocation3 [shape = 'u8[4096]{0}', space=vmem, size = 0x1000, scoped, tag = 'output window, operand 0']
    #allocation4 [shape = 's32[2]{0}', space=sflag, size = 0x8, scoped, tag = 'scoped memory for tpu_custom_call.1']
    %14 = vsyncpa [#allocation4], 0
    %s15 = scalar_lea.sflag [#allocation4], 1
    %16 = vsyncpa %s15, 0
    loop: start=0, step=1, limit=4
    $region2: #{tpu_custom_call.1} parent=1 // loop_pre_header
      _
    $region3: #{tpu_custom_call.1} parent=1 // loop_header
      %s18 = sphi 0, %s22
      %p19 = scmp.ge.s32.totalorder %s18, 4
      %s28 = sphi 0, %s30
      %s31 = sphi 0, %s28
      %s32 = sphi 0, %s31
      %s48 = sphi 0, %s32
      %s52 = sphi 0, %s52
      %s54 = sphi 0, %s52
      %s55 = sphi 0, %s54
      %s69 = sphi 0, %s55
      %s73 = sphi 0, %s73
      %s75 = sphi 0, %s73
      %s76 = sphi 0, %s75
      %s90 = sphi 0, %s76
      %s94 = sphi 0, %s94
      %s96 = sphi 0, %s94
      %s97 = sphi 0, %s96
      %s111 = sphi 0, %s97
      %s115 = sphi 0, %s115
      %s117 = sphi 0, %s115
      %s118 = sphi 0, %s117
      %s132 = sphi 0, %s118
      %s136 = sphi 0, %s136
      %s138 = sphi 0, %s136
      %s139 = sphi 0, %s138
      %s153 = sphi 0, %s139
      %s157 = sphi 0, %s157
      %s159 = sphi 0, %s157
      %s160 = sphi 0, %s159
      %s174 = sphi 0, %s160
      %s180 = sphi 0, %s182
      %s183 = sphi 0, %s180
      %s184 = sphi 0, %s183
      %s200 = sphi 0, %s184
    $region4: #{tpu_custom_call.1} parent=1 // loop_header_branch
      %21 = sbr.rel (%p19) target = $region8
    $region5: #{tpu_custom_call.1} parent=1 // loop_body
      %s23 = ssub.s32 %s18, 1
      %s24 = ssub.s32 %s18, 2
      %s25 = sadd.s32 %s18, 1
      %s26 = ssub.s32 %s18, %s25
      %p27 = scmp.eq.s32.totalorder %s26, 0
      %s29 = sadd.s32 %s28, 1
      %s30 = scalar_select %p27, %s28, %s29
      %p33 = pneg %p27
      %p34 = scmp.eq.s32.totalorder %s18, 1
      %p35 = por %p33, %p34
      %p36 = scmp.ne.s32.totalorder %s28, %s31
      %p37 = scmp.eq.s32.totalorder %s18, 0
      %p38 = por %p36, %p37
      %p39 = scmp.ne.s32.totalorder %s28, %s31
      %p40 = scmp.eq.s32.totalorder %s23, 1
      %p41 = por %p39, %p40
      %p42 = scmp.ne.s32.totalorder %s31, %s32
      %p43 = scmp.eq.s32.totalorder %s23, 0
      %p44 = por %p42, %p43
      %p45 = scmp.ne.s32.totalorder %s31, %s32
      %p46 = scmp.eq.s32.totalorder %s24, 1
      %p47 = por %p45, %p46
      %p49 = scmp.ne.s32.totalorder %s32, %s48
      %p50 = scmp.eq.s32.totalorder %s24, 0
      %p51 = por %p49, %p50
      %s53 = sadd.s32 %s52, 1
      %p56 = scmp.eq.s32.totalorder %s18, 1
      %p57 = scmp.ne.s32.totalorder %s52, %s54
      %p58 = scmp.eq.s32.totalorder %s18, 0
      %p59 = por %p57, %p58
      %p60 = scmp.ne.s32.totalorder %s52, %s54
      %p61 = scmp.eq.s32.totalorder %s23, 1
      %p62 = por %p60, %p61
      %p63 = scmp.ne.s32.totalorder %s54, %s55
      %p64 = scmp.eq.s32.totalorder %s23, 0
      %p65 = por %p63, %p64
      %p66 = scmp.ne.s32.totalorder %s54, %s55
      %p67 = scmp.eq.s32.totalorder %s24, 1
      %p68 = por %p66, %p67
      %p70 = scmp.ne.s32.totalorder %s55, %s69
      %p71 = scmp.eq.s32.totalorder %s24, 0
      %p72 = por %p70, %p71
      %s74 = sadd.s32 %s73, 1
      %p77 = scmp.eq.s32.totalorder %s18, 1
      %p78 = scmp.ne.s32.totalorder %s73, %s75
      %p79 = scmp.eq.s32.totalorder %s18, 0
      %p80 = por %p78, %p79
      %p81 = scmp.ne.s32.totalorder %s73, %s75
      %p82 = scmp.eq.s32.totalorder %s23, 1
      %p83 = por %p81, %p82
      %p84 = scmp.ne.s32.totalorder %s75, %s76
      %p85 = scmp.eq.s32.totalorder %s23, 0
      %p86 = por %p84, %p85
      %p87 = scmp.ne.s32.totalorder %s75, %s76
      %p88 = scmp.eq.s32.totalorder %s24, 1
      %p89 = por %p87, %p88
      %p91 = scmp.ne.s32.totalorder %s76, %s90
      %p92 = scmp.eq.s32.totalorder %s24, 0
      %p93 = por %p91, %p92
      %s95 = sadd.s32 %s94, 1
      %p98 = scmp.eq.s32.totalorder %s18, 1
      %p99 = scmp.ne.s32.totalorder %s94, %s96
      %p100 = scmp.eq.s32.totalorder %s18, 0
      %p101 = por %p99, %p100
      %p102 = scmp.ne.s32.totalorder %s94, %s96
      %p103 = scmp.eq.s32.totalorder %s23, 1
      %p104 = por %p102, %p103
      %p105 = scmp.ne.s32.totalorder %s96, %s97
      %p106 = scmp.eq.s32.totalorder %s23, 0
      %p107 = por %p105, %p106
      %p108 = scmp.ne.s32.totalorder %s96, %s97
      %p109 = scmp.eq.s32.totalorder %s24, 1
      %p110 = por %p108, %p109
      %p112 = scmp.ne.s32.totalorder %s97, %s111
      %p113 = scmp.eq.s32.totalorder %s24, 0
      %p114 = por %p112, %p113
      %s116 = sadd.s32 %s115, 1
      %p119 = scmp.eq.s32.totalorder %s18, 1
      %p120 = scmp.ne.s32.totalorder %s115, %s117
      %p121 = scmp.eq.s32.totalorder %s18, 0
      %p122 = por %p120, %p121
      %p123 = scmp.ne.s32.totalorder %s115, %s117
      %p124 = scmp.eq.s32.totalorder %s23, 1
      %p125 = por %p123, %p124
      %p126 = scmp.ne.s32.totalorder %s117, %s118
      %p127 = scmp.eq.s32.totalorder %s23, 0
      %p128 = por %p126, %p127
      %p129 = scmp.ne.s32.totalorder %s117, %s118
      %p130 = scmp.eq.s32.totalorder %s24, 1
      %p131 = por %p129, %p130
      %p133 = scmp.ne.s32.totalorder %s118, %s132
      %p134 = scmp.eq.s32.totalorder %s24, 0
      %p135 = por %p133, %p134
      %s137 = sadd.s32 %s136, 1
      %p140 = scmp.eq.s32.totalorder %s18, 1
      %p141 = scmp.ne.s32.totalorder %s136, %s138
      %p142 = scmp.eq.s32.totalorder %s18, 0
      %p143 = por %p141, %p142
      %p144 = scmp.ne.s32.totalorder %s136, %s138
      %p145 = scmp.eq.s32.totalorder %s23, 1
      %p146 = por %p144, %p145
      %p147 = scmp.ne.s32.totalorder %s138, %s139
      %p148 = scmp.eq.s32.totalorder %s23, 0
      %p149 = por %p147, %p148
      %p150 = scmp.ne.s32.totalorder %s138, %s139
      %p151 = scmp.eq.s32.totalorder %s24, 1
      %p152 = por %p150, %p151
      %p154 = scmp.ne.s32.totalorder %s139, %s153
      %p155 = scmp.eq.s32.totalorder %s24, 0
      %p156 = por %p154, %p155
      %s158 = sadd.s32 %s157, 1
      %p161 = scmp.eq.s32.totalorder %s18, 1
      %p162 = scmp.ne.s32.totalorder %s157, %s159
      %p163 = scmp.eq.s32.totalorder %s18, 0
      %p164 = por %p162, %p163
      %p165 = scmp.ne.s32.totalorder %s157, %s159
      %p166 = scmp.eq.s32.totalorder %s23, 1
      %p167 = por %p165, %p166
      %p168 = scmp.ne.s32.totalorder %s159, %s160
      %p169 = scmp.eq.s32.totalorder %s23, 0
      %p170 = por %p168, %p169
      %p171 = scmp.ne.s32.totalorder %s159, %s160
      %p172 = scmp.eq.s32.totalorder %s24, 1
      %p173 = por %p171, %p172
      %p175 = scmp.ne.s32.totalorder %s160, %s174
      %p176 = scmp.eq.s32.totalorder %s24, 0
      %p177 = por %p175, %p176
      %s178 = ssub.s32 %s18, %s25
      %p179 = scmp.eq.s32.totalorder %s178, 0
      %s181 = sadd.s32 %s180, 1
      %s182 = scalar_select %p179, %s180, %s181
      %p185 = pneg %p179
      %p186 = scmp.eq.s32.totalorder %s18, 1
      %p187 = por %p185, %p186
      %p188 = scmp.ne.s32.totalorder %s180, %s183
      %p189 = scmp.eq.s32.totalorder %s18, 0
      %p190 = por %p188, %p189
      %p191 = scmp.ne.s32.totalorder %s180, %s183
      %p192 = scmp.eq.s32.totalorder %s23, 1
      %p193 = por %p191, %p192
      %p194 = scmp.ne.s32.totalorder %s183, %s184
      %p195 = scmp.eq.s32.totalorder %s23, 0
      %p196 = por %p194, %p195
      %p197 = scmp.ne.s32.totalorder %s183, %s184
      %p198 = scmp.eq.s32.totalorder %s24, 1
      %p199 = por %p197, %p198
      %p201 = scmp.ne.s32.totalorder %s184, %s200
      %p202 = scmp.eq.s32.totalorder %s24, 0
      %p203 = por %p201, %p202
      %p204 = scmp.le.s32.totalorder 1, %s18
      %p205 = scmp.lt.s32.totalorder %s18, 3
      %p206 = pnand %p204, %p205
      %p207 = pneg %p206
      // Predicated region
      $region9: #{tpu_custom_call.1} parent=5 // pred_check
        _
      $region10: #{tpu_custom_call.1} parent=5 // pred_check_branch
        %209 = sbr.rel (%p206) target = $region12
      $region11: #{tpu_custom_call.1} parent=5 // pred_region
        %s210 = ssub.s32 %s18, 1
        // Predicated region
        $region13: #{tpu_custom_call.1} parent=11 // pred_check
          %p211 = pneg %p65
        $region14: #{tpu_custom_call.1} parent=11 // pred_check_branch
          %213 = sbr.rel (%p211) target = $region16
        $region15: #{tpu_custom_call.1} parent=11 // pred_region
          _
        $region16: #{tpu_custom_call.1} parent=11 // pred_fallthru
          _
        // Predicated region
        $region17: #{tpu_custom_call.1} parent=11 // pred_check
          %p214 = pneg %p86
        $region18: #{tpu_custom_call.1} parent=11 // pred_check_branch
          %216 = sbr.rel (%p214) target = $region20
        $region19: #{tpu_custom_call.1} parent=11 // pred_region
          _
        $region20: #{tpu_custom_call.1} parent=11 // pred_fallthru
          _
        // Predicated region
        $region21: #{tpu_custom_call.1} parent=11 // pred_check
          %p217 = pneg %p107
        $region22: #{tpu_custom_call.1} parent=11 // pred_check_branch
          %219 = sbr.rel (%p217) target = $region24
        $region23: #{tpu_custom_call.1} parent=11 // pred_region
          _
        $region24: #{tpu_custom_call.1} parent=11 // pred_fallthru
          _
        // Predicated region
        $region25: #{tpu_custom_call.1} parent=11 // pred_check
          %p220 = pneg %p128
        $region26: #{tpu_custom_call.1} parent=11 // pred_check_branch
          %222 = sbr.rel (%p220) target = $region28
        $region27: #{tpu_custom_call.1} parent=11 // pred_region
          _
        $region28: #{tpu_custom_call.1} parent=11 // pred_fallthru
          _
        // Predicated region
        $region29: #{tpu_custom_call.1} parent=11 // pred_check
          %p223 = pneg %p149
        $region30: #{tpu_custom_call.1} parent=11 // pred_check_branch
          %225 = sbr.rel (%p223) target = $region32
        $region31: #{tpu_custom_call.1} parent=11 // pred_region
          _
        $region32: #{tpu_custom_call.1} parent=11 // pred_fallthru
          _
        // Predicated region
        $region33: #{tpu_custom_call.1} parent=11 // pred_check
          %p226 = pneg %p170
        $region34: #{tpu_custom_call.1} parent=11 // pred_check_branch
          %228 = sbr.rel (%p226) target = $region36
        $region35: #{tpu_custom_call.1} parent=11 // pred_region
          _
        $region36: #{tpu_custom_call.1} parent=11 // pred_fallthru
          _
      $region12: #{tpu_custom_call.1} parent=5 // pred_fallthru
        _
      %p229 = scmp.lt.s32.totalorder %s18, 2
      // Predicated region
      $region37: #{tpu_custom_call.1} parent=5 // pred_check
        %p230 = pneg %p229
      $region38: #{tpu_custom_call.1} parent=5 // pred_check_branch
        %232 = sbr.rel (%p230) target = $region40
      $region39: #{tpu_custom_call.1} parent=5 // pred_region
        // Predicated region
        $region41: #{tpu_custom_call.1} parent=39 // pred_check
          %p233 = pneg %p38
        $region42: #{tpu_custom_call.1} parent=39 // pred_check_branch
          %235 = sbr.rel (%p233) target = $region44
        $region43: #{tpu_custom_call.1} parent=39 // pred_region
          %s236 = smul.u32 4, %s18
          %p237 = scmp.lt.s32.totalorder %s236, 7
          %s238 = scalar_select %p237, %s236, 7
          %s239 = scalar_lea.vmem %s0, %s238
          %s240 = smul.u32 4, %s18
        $region44: #{tpu_custom_call.1} parent=39 // pred_fallthru
          _
      $region40: #{tpu_custom_call.1} parent=5 // pred_fallthru
        _
      %p241 = scmp.le.s32.totalorder 1, %s18
      %p242 = scmp.lt.s32.totalorder %s18, 3
      %p243 = pnand %p241, %p242
      %p244 = pneg %p243
      // Predicated region
      $region45: #{tpu_custom_call.1} parent=5 // pred_check
        _
      $region46: #{tpu_custom_call.1} parent=5 // pred_check_branch
        %246 = sbr.rel (%p243) target = $region48
      $region47: #{tpu_custom_call.1} parent=5 // pred_region
        %s247 = ssub.s32 %s18, 1
        %s248 = smul.u32 4, %s23
        %p249 = scmp.lt.s32.totalorder %s248, 7
        %s250 = scalar_select %p249, %s248, 7
        %s251 = scalar_lea.vmem %s0, %s250
        %p252 = pneg %p44
        %p253 = pneg %p41
        %p254 = pneg %p65
        %p255 = pneg %p62
        %p256 = pneg %p86
        %p257 = pneg %p83
        %p258 = pneg %p107
        %p259 = pneg %p104
        %p260 = pneg %p128
        %p261 = pneg %p125
        %p262 = pneg %p149
        %p263 = pneg %p146
        %p264 = pneg %p170
        %p265 = pneg %p167
        %p266 = pneg %p196
        %p267 = pneg %p193
        %s268 = sand.u32 %s183, 1
        %s269 = scalar_lea.sflag [#allocation4], %s268
        %s270 = sand.u32 %s183, 1
        %s271 = smul.addr %s270, 4
        %s272 = scalar_lea.vmem [#allocation3], %s271
        %s273 = smul.u32 4, %s23
        %p274 = scmp.lt.s32.totalorder %s273, 7
        %s275 = scalar_select %p274, %s273, 7
        %s276 = scalar_lea.vmem %s0, %s275
        %s277 = smul.u32 4, %s23
        %s278 = smul.u32 4, %s23
        %v279 = vld [vmem:[%s276] sm:$0xf]
        %v280 = vld [vmem:[%s1] sm:$0xff]
        %v281 = vld [vmem:[%s1 + $0x8] sm:$0xff]
        %v282 = vld [vmem:[%s1 + $0x10] sm:$0xff]
        %v283 = vld [vmem:[%s1 + $0x18] sm:$0xff]
        %v284 = vld [vmem:[%s2] sm:$0xff]
        %v285 = vld [vmem:[%s2 + $0x8] sm:$0xff]
        %v286 = vld [vmem:[%s2 + $0x10] sm:$0xff]
        %v287 = vld [vmem:[%s2 + $0x18] sm:$0xff]
        %289 = vset.pattern.permute.xlu0 0
        %290 = vperm.xlu0 %289, %v280
        %v291 = vpop.permute.xlu0 %290
        %294 = vset.pattern.permute.xlu0 0
        %295 = vperm.xlu0 %294, %v281
        %v296 = vpop.permute.xlu0 %295
        %299 = vset.pattern.permute.xlu0 0
        %300 = vperm.xlu0 %299, %v282
        %v301 = vpop.permute.xlu0 %300
        %304 = vset.pattern.permute.xlu0 0
        %305 = vperm.xlu0 %304, %v283
        %v306 = vpop.permute.xlu0 %305
        %v309 = vperm.slane %v279, 0
        %v310 = vperm.slane %v279, 1
        %v311 = vperm.slane %v279, 2
        %v312 = vperm.slane %v279, 3
        %v317 = vmul.f32 %v291, %v309
        %v318 = vmul.f32 %v291, %v310
        %v319 = vmul.f32 %v291, %v311
        %v320 = vmul.f32 %v291, %v312
        %v321 = vmul.f32 %v296, %v309
        %v322 = vmul.f32 %v296, %v310
        %v323 = vmul.f32 %v296, %v311
        %v324 = vmul.f32 %v296, %v312
        %v325 = vmul.f32 %v301, %v309
        %v326 = vmul.f32 %v301, %v310
        %v327 = vmul.f32 %v301, %v311
        %v328 = vmul.f32 %v301, %v312
        %v329 = vmul.f32 %v306, %v309
        %v330 = vmul.f32 %v306, %v310
        %v331 = vmul.f32 %v306, %v311
        %v332 = vmul.f32 %v306, %v312
        %334 = vset.pattern.permute.xlu0 0
        %335 = vperm.xlu0 %334, %v284
        %v336 = vpop.permute.xlu0 %335
        %339 = vset.pattern.permute.xlu0 0
        %340 = vperm.xlu0 %339, %v285
        %v341 = vpop.permute.xlu0 %340
        %344 = vset.pattern.permute.xlu0 0
        %345 = vperm.xlu0 %344, %v286
        %v346 = vpop.permute.xlu0 %345
        %349 = vset.pattern.permute.xlu0 0
        %350 = vperm.xlu0 %349, %v287
        %v351 = vpop.permute.xlu0 %350
        %v353 = vadd.f32 %v317, %v336
        %v354 = vadd.f32 %v318, %v336
        %v355 = vadd.f32 %v319, %v336
        %v356 = vadd.f32 %v320, %v336
        %v357 = vadd.f32 %v321, %v341
        %v358 = vadd.f32 %v322, %v341
        %v359 = vadd.f32 %v323, %v341
        %v360 = vadd.f32 %v324, %v341
        %v361 = vadd.f32 %v325, %v346
        %v362 = vadd.f32 %v326, %v346
        %v363 = vadd.f32 %v327, %v346
        %v364 = vadd.f32 %v328, %v346
        %v365 = vadd.f32 %v329, %v351
        %v366 = vadd.f32 %v330, %v351
        %v367 = vadd.f32 %v331, %v351
        %v368 = vadd.f32 %v332, %v351
        %v369 = vtanh.pop %v353
        %v370 = vtanh.pop %v354
        %v371 = vtanh.pop %v355
        %v372 = vtanh.pop %v356
        %v373 = vtanh.pop %v357
        %v374 = vtanh.pop %v358
        %v375 = vtanh.pop %v359
        %v376 = vtanh.pop %v360
        %v377 = vtanh.pop %v361
        %v378 = vtanh.pop %v362
        %v379 = vtanh.pop %v363
        %v380 = vtanh.pop %v364
        %v381 = vtanh.pop %v365
        %v382 = vtanh.pop %v366
        %v383 = vtanh.pop %v367
        %v384 = vtanh.pop %v368
        %v385 = vld [vmem:[%s3] sm:$0xff]
        %v386 = vld [vmem:[%s3 + $0x8] sm:$0xff]
        %v387 = vld [vmem:[%s3 + $0x10] sm:$0xff]
        %v388 = vld [vmem:[%s3 + $0x18] sm:$0xff]
        %v389 = vld [vmem:[%s4] sm:$0xff]
        %v390 = vld [vmem:[%s4 + $0x8] sm:$0xff]
        %v391 = vld [vmem:[%s4 + $0x10] sm:$0xff]
        %v392 = vld [vmem:[%s4 + $0x18] sm:$0xff]
        %394 = vset.pattern.permute.xlu0 0
        %395 = vperm.xlu0 %394, %v389
        %v396 = vpop.permute.xlu0 %395
        %399 = vset.pattern.permute.xlu0 0
        %400 = vperm.xlu0 %399, %v390
        %v401 = vpop.permute.xlu0 %400
        %404 = vset.pattern.permute.xlu0 0
        %405 = vperm.xlu0 %404, %v391
        %v406 = vpop.permute.xlu0 %405
        %409 = vset.pattern.permute.xlu0 0
        %410 = vperm.xlu0 %409, %v392
        %v411 = vpop.permute.xlu0 %410
        %vm413 = vcmask 261120
        %v415 = vsel %vm413, %v385, 0
        %v418 = vsel %vm413, %v386, 0
        %v421 = vsel %vm413, %v387, 0
        %v424 = vsel %vm413, %v388, 0
        %426 = vmatpush.msra.mxu0 0.0
        %427 = vmatpush.msra.mxu0 0.0
        %428 = vmatpush.msra.mxu0 0.0
        %429 = vmatpush.msra.mxu0 0.0
        %430 = vmatpush.msra.mxu0 0.0
        %431 = vmatpush.msra.mxu0 0.0
        %432 = vmatpush.msra.mxu0 0.0
        %433 = vmatpush.msra.mxu0 0.0
        %434 = vmatpush.msra.mxu0 0.0
        %435 = vmatpush.msra.mxu0 0.0
        %436 = vmatpush.msra.mxu0 0.0
        %437 = vmatpush.msra.mxu0 0.0
        %438 = vmatpush.msra.mxu0 %v381
        %439 = vmatpush.msra.mxu0 %v377
        %440 = vmatpush.msra.mxu0 %v373
        %441 = vmatpush.msra.mxu0 %v369
        %442 = vmatmul.f32.gmra.mxu0 %v415
        %v443 = vpop.f32.mrf.mxu0
        %v444 = vadd.f32 %v396, %v443
        %445 = vmatmul.f32.gmra.mxu0 %v418
        %v446 = vpop.f32.mrf.mxu0
        %v447 = vadd.f32 %v401, %v446
        %448 = vmatmul.f32.gmra.mxu0 %v421
        %v449 = vpop.f32.mrf.mxu0
        %v450 = vadd.f32 %v406, %v449
        %451 = vmatmul.f32.gmra.mxu0 %v424
        %v452 = vpop.f32.mrf.mxu0
        %v453 = vadd.f32 %v411, %v452
        %454 = vdwg.mxu0
        %455 = vmatpush.msra.mxu0 0.0
        %456 = vmatpush.msra.mxu0 0.0
        %457 = vmatpush.msra.mxu0 0.0
        %458 = vmatpush.msra.mxu0 0.0
        %459 = vmatpush.msra.mxu0 0.0
        %460 = vmatpush.msra.mxu0 0.0
        %461 = vmatpush.msra.mxu0 0.0
        %462 = vmatpush.msra.mxu0 0.0
        %463 = vmatpush.msra.mxu0 0.0
        %464 = vmatpush.msra.mxu0 0.0
        %465 = vmatpush.msra.mxu0 0.0
        %466 = vmatpush.msra.mxu0 0.0
        %467 = vmatpush.msra.mxu0 %v382
        %468 = vmatpush.msra.mxu0 %v378
        %469 = vmatpush.msra.mxu0 %v374
        %470 = vmatpush.msra.mxu0 %v370
        %471 = vmatmul.f32.gmra.mxu0 %v415
        %v472 = vpop.f32.mrf.mxu0
        %v473 = vadd.f32 %v396, %v472
        %474 = vmatmul.f32.gmra.mxu0 %v418
        %v475 = vpop.f32.mrf.mxu0
        %v476 = vadd.f32 %v401, %v475
        %477 = vmatmul.f32.gmra.mxu0 %v421
        %v478 = vpop.f32.mrf.mxu0
        %v479 = vadd.f32 %v406, %v478
        %480 = vmatmul.f32.gmra.mxu0 %v424
        %v481 = vpop.f32.mrf.mxu0
        %v482 = vadd.f32 %v411, %v481
        %483 = vdwg.mxu0
        %484 = vmatpush.msra.mxu0 0.0
        %485 = vmatpush.msra.mxu0 0.0
        %486 = vmatpush.msra.mxu0 0.0
        %487 = vmatpush.msra.mxu0 0.0
        %488 = vmatpush.msra.mxu0 0.0
        %489 = vmatpush.msra.mxu0 0.0
        %490 = vmatpush.msra.mxu0 0.0
        %491 = vmatpush.msra.mxu0 0.0
        %492 = vmatpush.msra.mxu0 0.0
        %493 = vmatpush.msra.mxu0 0.0
        %494 = vmatpush.msra.mxu0 0.0
        %495 = vmatpush.msra.mxu0 0.0
        %496 = vmatpush.msra.mxu0 %v383
        %497 = vmatpush.msra.mxu0 %v379
        %498 = vmatpush.msra.mxu0 %v375
        %499 = vmatpush.msra.mxu0 %v371
        %500 = vmatmul.f32.gmra.mxu0 %v415
        %v501 = vpop.f32.mrf.mxu0
        %v502 = vadd.f32 %v396, %v501
        %503 = vmatmul.f32.gmra.mxu0 %v418
        %v504 = vpop.f32.mrf.mxu0
        %v505 = vadd.f32 %v401, %v504
        %506 = vmatmul.f32.gmra.mxu0 %v421
        %v507 = vpop.f32.mrf.mxu0
        %v508 = vadd.f32 %v406, %v507
        %509 = vmatmul.f32.gmra.mxu0 %v424
        %v510 = vpop.f32.mrf.mxu0
        %v511 = vadd.f32 %v411, %v510
        %512 = vdwg.mxu0
        %513 = vmatpush.msra.mxu0 0.0
        %514 = vmatpush.msra.mxu0 0.0
        %515 = vmatpush.msra.mxu0 0.0
        %516 = vmatpush.msra.mxu0 0.0
        %517 = vmatpush.msra.mxu0 0.0
        %518 = vmatpush.msra.mxu0 0.0
        %519 = vmatpush.msra.mxu0 0.0
        %520 = vmatpush.msra.mxu0 0.0
        %521 = vmatpush.msra.mxu0 0.0
        %522 = vmatpush.msra.mxu0 0.0
        %523 = vmatpush.msra.mxu0 0.0
        %524 = vmatpush.msra.mxu0 0.0
        %525 = vmatpush.msra.mxu0 %v384
        %526 = vmatpush.msra.mxu0 %v380
        %527 = vmatpush.msra.mxu0 %v376
        %528 = vmatpush.msra.mxu0 %v372
        %529 = vmatmul.f32.gmra.mxu0 %v415
        %v530 = vpop.f32.mrf.mxu0
        %v531 = vadd.f32 %v396, %v530
        %532 = vmatmul.f32.gmra.mxu0 %v418
        %v533 = vpop.f32.mrf.mxu0
        %v534 = vadd.f32 %v401, %v533
        %535 = vmatmul.f32.gmra.mxu0 %v421
        %v536 = vpop.f32.mrf.mxu0
        %v537 = vadd.f32 %v406, %v536
        %538 = vmatmul.f32.gmra.mxu0 %v424
        %v539 = vpop.f32.mrf.mxu0
        %v540 = vadd.f32 %v411, %v539
        %541 = vdwg.mxu0
        %v542 = vtanh.pop %v444
        %v543 = vtanh.pop %v473
        %v544 = vtanh.pop %v502
        %v545 = vtanh.pop %v531
        %v546 = vtanh.pop %v447
        %v547 = vtanh.pop %v476
        %v548 = vtanh.pop %v505
        %v549 = vtanh.pop %v534
        %v550 = vtanh.pop %v450
        %v551 = vtanh.pop %v479
        %v552 = vtanh.pop %v508
        %v553 = vtanh.pop %v537
        %v554 = vtanh.pop %v453
        %v555 = vtanh.pop %v482
        %v556 = vtanh.pop %v511
        %v557 = vtanh.pop %v540
        %s558 = scalar_lea.vmem %s3, 32
        %v559 = vld [vmem:[%s558] sm:$0xff]
        %v560 = vld [vmem:[%s558 + $0x8] sm:$0xff]
        %v561 = vld [vmem:[%s558 + $0x10] sm:$0xff]
        %v562 = vld [vmem:[%s558 + $0x18] sm:$0xff]
        %s563 = scalar_lea.vmem %s4, 32
        %v564 = vld [vmem:[%s563] sm:$0xff]
        %v565 = vld [vmem:[%s563 + $0x8] sm:$0xff]
        %v566 = vld [vmem:[%s563 + $0x10] sm:$0xff]
        %v567 = vld [vmem:[%s563 + $0x18] sm:$0xff]
        %569 = vset.pattern.permute.xlu0 0
        %570 = vperm.xlu0 %569, %v564
        %v571 = vpop.permute.xlu0 %570
        %574 = vset.pattern.permute.xlu0 0
        %575 = vperm.xlu0 %574, %v565
        %v576 = vpop.permute.xlu0 %575
        %579 = vset.pattern.permute.xlu0 0
        %580 = vperm.xlu0 %579, %v566
        %v581 = vpop.permute.xlu0 %580
        %584 = vset.pattern.permute.xlu0 0
        %585 = vperm.xlu0 %584, %v567
        %v586 = vpop.permute.xlu0 %585
        %v589 = vsel %vm413, %v559, 0
        %v592 = vsel %vm413, %v560, 0
        %v595 = vsel %vm413, %v561, 0
        %v598 = vsel %vm413, %v562, 0
        %600 = vmatpush.msra.mxu0 0.0
        %601 = vmatpush.msra.mxu0 0.0
        %602 = vmatpush.msra.mxu0 0.0
        %603 = vmatpush.msra.mxu0 0.0
        %604 = vmatpush.msra.mxu0 0.0
        %605 = vmatpush.msra.mxu0 0.0
        %606 = vmatpush.msra.mxu0 0.0
        %607 = vmatpush.msra.mxu0 0.0
        %608 = vmatpush.msra.mxu0 0.0
        %609 = vmatpush.msra.mxu0 0.0
        %610 = vmatpush.msra.mxu0 0.0
        %611 = vmatpush.msra.mxu0 0.0
        %612 = vmatpush.msra.mxu0 %v554
        %613 = vmatpush.msra.mxu0 %v550
        %614 = vmatpush.msra.mxu0 %v546
        %615 = vmatpush.msra.mxu0 %v542
        %616 = vmatmul.f32.gmra.mxu0 %v589
        %v617 = vpop.f32.mrf.mxu0
        %v618 = vadd.f32 %v571, %v617
        %619 = vmatmul.f32.gmra.mxu0 %v592
        %v620 = vpop.f32.mrf.mxu0
        %v621 = vadd.f32 %v576, %v620
        %622 = vmatmul.f32.gmra.mxu0 %v595
        %v623 = vpop.f32.mrf.mxu0
        %v624 = vadd.f32 %v581, %v623
        %625 = vmatmul.f32.gmra.mxu0 %v598
        %v626 = vpop.f32.mrf.mxu0
        %v627 = vadd.f32 %v586, %v626
        %628 = vdwg.mxu0
        %629 = vmatpush.msra.mxu0 0.0
        %630 = vmatpush.msra.mxu0 0.0
        %631 = vmatpush.msra.mxu0 0.0
        %632 = vmatpush.msra.mxu0 0.0
        %633 = vmatpush.msra.mxu0 0.0
        %634 = vmatpush.msra.mxu0 0.0
        %635 = vmatpush.msra.mxu0 0.0
        %636 = vmatpush.msra.mxu0 0.0
        %637 = vmatpush.msra.mxu0 0.0
        %638 = vmatpush.msra.mxu0 0.0
        %639 = vmatpush.msra.mxu0 0.0
        %640 = vmatpush.msra.mxu0 0.0
        %641 = vmatpush.msra.mxu0 %v555
        %642 = vmatpush.msra.mxu0 %v551
        %643 = vmatpush.msra.mxu0 %v547
        %644 = vmatpush.msra.mxu0 %v543
        %645 = vmatmul.f32.gmra.mxu0 %v589
        %v646 = vpop.f32.mrf.mxu0
        %v647 = vadd.f32 %v571, %v646
        %648 = vmatmul.f32.gmra.mxu0 %v592
        %v649 = vpop.f32.mrf.mxu0
        %v650 = vadd.f32 %v576, %v649
        %651 = vmatmul.f32.gmra.mxu0 %v595
        %v652 = vpop.f32.mrf.mxu0
        %v653 = vadd.f32 %v581, %v652
        %654 = vmatmul.f32.gmra.mxu0 %v598
        %v655 = vpop.f32.mrf.mxu0
        %v656 = vadd.f32 %v586, %v655
        %657 = vdwg.mxu0
        %658 = vmatpush.msra.mxu0 0.0
        %659 = vmatpush.msra.mxu0 0.0
        %660 = vmatpush.msra.mxu0 0.0
        %661 = vmatpush.msra.mxu0 0.0
        %662 = vmatpush.msra.mxu0 0.0
        %663 = vmatpush.msra.mxu0 0.0
        %664 = vmatpush.msra.mxu0 0.0
        %665 = vmatpush.msra.mxu0 0.0
        %666 = vmatpush.msra.mxu0 0.0
        %667 = vmatpush.msra.mxu0 0.0
        %668 = vmatpush.msra.mxu0 0.0
        %669 = vmatpush.msra.mxu0 0.0
        %670 = vmatpush.msra.mxu0 %v556
        %671 = vmatpush.msra.mxu0 %v552
        %672 = vmatpush.msra.mxu0 %v548
        %673 = vmatpush.msra.mxu0 %v544
        %674 = vmatmul.f32.gmra.mxu0 %v589
        %v675 = vpop.f32.mrf.mxu0
        %v676 = vadd.f32 %v571, %v675
        %677 = vmatmul.f32.gmra.mxu0 %v592
        %v678 = vpop.f32.mrf.mxu0
        %v679 = vadd.f32 %v576, %v678
        %680 = vmatmul.f32.gmra.mxu0 %v595
        %v681 = vpop.f32.mrf.mxu0
        %v682 = vadd.f32 %v581, %v681
        %683 = vmatmul.f32.gmra.mxu0 %v598
        %v684 = vpop.f32.mrf.mxu0
        %v685 = vadd.f32 %v586, %v684
        %686 = vdwg.mxu0
        %687 = vmatpush.msra.mxu0 0.0
        %688 = vmatpush.msra.mxu0 0.0
        %689 = vmatpush.msra.mxu0 0.0
        %690 = vmatpush.msra.mxu0 0.0
        %691 = vmatpush.msra.mxu0 0.0
        %692 = vmatpush.msra.mxu0 0.0
        %693 = vmatpush.msra.mxu0 0.0
        %694 = vmatpush.msra.mxu0 0.0
        %695 = vmatpush.msra.mxu0 0.0
        %696 = vmatpush.msra.mxu0 0.0
        %697 = vmatpush.msra.mxu0 0.0
        %698 = vmatpush.msra.mxu0 0.0
        %699 = vmatpush.msra.mxu0 %v557
        %700 = vmatpush.msra.mxu0 %v553
        %701 = vmatpush.msra.mxu0 %v549
        %702 = vmatpush.msra.mxu0 %v545
        %703 = vmatmul.f32.gmra.mxu0 %v589
        %v704 = vpop.f32.mrf.mxu0
        %v705 = vadd.f32 %v571, %v704
        %706 = vmatmul.f32.gmra.mxu0 %v592
        %v707 = vpop.f32.mrf.mxu0
        %v708 = vadd.f32 %v576, %v707
        %709 = vmatmul.f32.gmra.mxu0 %v595
        %v710 = vpop.f32.mrf.mxu0
        %v711 = vadd.f32 %v581, %v710
        %712 = vmatmul.f32.gmra.mxu0 %v598
        %v713 = vpop.f32.mrf.mxu0
        %v714 = vadd.f32 %v586, %v713
        %715 = vdwg.mxu0
        %v716 = vtanh.pop %v618
        %v717 = vtanh.pop %v647
        %v718 = vtanh.pop %v676
        %v719 = vtanh.pop %v705
        %v720 = vtanh.pop %v621
        %v721 = vtanh.pop %v650
        %v722 = vtanh.pop %v679
        %v723 = vtanh.pop %v708
        %v724 = vtanh.pop %v624
        %v725 = vtanh.pop %v653
        %v726 = vtanh.pop %v682
        %v727 = vtanh.pop %v711
        %v728 = vtanh.pop %v627
        %v729 = vtanh.pop %v656
        %v730 = vtanh.pop %v685
        %v731 = vtanh.pop %v714
        %v732 = vld [vmem:[%s5] sm:$0xff]
        %v733 = vld [vmem:[%s5 + $0x8] sm:$0xff]
        %v734 = vld [vmem:[%s5 + $0x10] sm:$0xff]
        %v735 = vld [vmem:[%s5 + $0x18] sm:$0xff]
        %v736 = vld [vmem:[#allocation2] sm:$0x1]
        %738 = vset.pattern.permute.xlu0 0
        %739 = vperm.xlu0 %738, %v732
        %v740 = vpop.permute.xlu0 %739
        %743 = vset.pattern.permute.xlu0 0
        %744 = vperm.xlu0 %743, %v733
        %v745 = vpop.permute.xlu0 %744
        %748 = vset.pattern.permute.xlu0 0
        %749 = vperm.xlu0 %748, %v734
        %v750 = vpop.permute.xlu0 %749
        %753 = vset.pattern.permute.xlu0 0
        %754 = vperm.xlu0 %753, %v735
        %v755 = vpop.permute.xlu0 %754
        %v757 = vmul.f32 %v716, %v740
        %v758 = vmul.f32 %v717, %v740
        %v759 = vmul.f32 %v718, %v740
        %v760 = vmul.f32 %v719, %v740
        %v761 = vmul.f32 %v720, %v745
        %v762 = vmul.f32 %v721, %v745
        %v763 = vmul.f32 %v722, %v745
        %v764 = vmul.f32 %v723, %v745
        %v765 = vmul.f32 %v724, %v750
        %v766 = vmul.f32 %v725, %v750
        %v767 = vmul.f32 %v726, %v750
        %v768 = vmul.f32 %v727, %v750
        %v769 = vmul.f32 %v728, %v755
        %v770 = vmul.f32 %v729, %v755
        %v771 = vmul.f32 %v730, %v755
        %v772 = vmul.f32 %v731, %v755
        %v773 = vadd.f32 %v757, %v761
        %v774 = vadd.f32 %v773, %v765
        %v775 = vadd.f32 %v774, %v769
        %v776 = vrot.slane %v775, 4
        %v777 = vadd.f32 %v775, %v776
        %v778 = vrot.slane %v777, 2
        %v779 = vadd.f32 %v777, %v778
        %v780 = vrot.slane %v779, 1
        %v781 = vadd.f32 %v779, %v780
        %v782 = vadd.f32 %v758, %v762
        %v783 = vadd.f32 %v782, %v766
        %v784 = vadd.f32 %v783, %v770
        %v785 = vrot.slane %v784, 4
        %v786 = vadd.f32 %v784, %v785
        %v787 = vrot.slane %v786, 2
        %v788 = vadd.f32 %v786, %v787
        %v789 = vrot.slane %v788, 1
        %v790 = vadd.f32 %v788, %v789
        %v791 = vadd.f32 %v759, %v763
        %v792 = vadd.f32 %v791, %v767
        %v793 = vadd.f32 %v792, %v771
        %v794 = vrot.slane %v793, 4
        %v795 = vadd.f32 %v793, %v794
        %v796 = vrot.slane %v795, 2
        %v797 = vadd.f32 %v795, %v796
        %v798 = vrot.slane %v797, 1
        %v799 = vadd.f32 %v797, %v798
        %v800 = vadd.f32 %v760, %v764
        %v801 = vadd.f32 %v800, %v768
        %v802 = vadd.f32 %v801, %v772
        %v803 = vrot.slane %v802, 4
        %v804 = vadd.f32 %v802, %v803
        %v805 = vrot.slane %v804, 2
        %v806 = vadd.f32 %v804, %v805
        %v807 = vrot.slane %v806, 1
        %v808 = vadd.f32 %v806, %v807
        %810 = vset.pattern.permute.xlu0 0
        %811 = vperm.xlu0 %810, %v736
        %v812 = vpop.permute.xlu0 %811
        %v814 = vperm.slane %v812, 0
        %v815 = vadd.f32 %v781, %v814
        %v816 = vadd.f32 %v790, %v814
        %v817 = vadd.f32 %v799, %v814
        %v818 = vadd.f32 %v808, %v814
        %v823 = vrot.slane %v816, 7
        %v824 = vrot.slane %v817, 6
        %v825 = vrot.slane %v818, 5
        %vm826 = vcmask 1040384
        %v827 = vsel %vm826, %v815, %v823
        %vm828 = vcmask 1042434
        %v829 = vsel %vm828, %v824, %v825
        %vm830 = vcmask 1041408
        %v831 = vsel %vm830, %v827, %v829
        %v833 = vlaneseq
        %vm834 = vcmp.ge.s32.totalorder %v833, 0
        %vm835 = vcmp.lt.s32.totalorder %v833, 512
        %vm836 = vmand %vm834, %vm835
        %837 = vst.msk [vmem:[%s272] sm:$0xf] %vm836, %v831
        %s838 = sand.u32 %s183, 1
        %s839 = scalar_lea.sflag [#allocation4], %s838
        %s840 = sand.u32 %s183, 1
        %s841 = smul.addr %s840, 4
        %s842 = scalar_lea.vmem [#allocation3], %s841
        // Predicated region
        $region49: #{tpu_custom_call.1} parent=47 // pred_check
          %p843 = pneg %p193
        $region50: #{tpu_custom_call.1} parent=47 // pred_check_branch
          %845 = sbr.rel (%p843) target = $region52
        $region51: #{tpu_custom_call.1} parent=47 // pred_region
          %s846 = smul.u32 4, %s23
          %848 = vsyncadd %s839, 0
          %s849 = scalar_lea.hbm %s7, %s846
          %s851 = sshll.u32 %s842, 4
          %s852 = int_to_ptr.vmem [resolvable:$true] %s851
          %s853 = sshll.u32 %s849, 4
          %s854 = int_to_ptr.hbm [resolvable:$true] %s853
          %856 = dma.vmem_to_hbm [thread:$0]  %s852, 64, %s854, %s839
        $region52: #{tpu_custom_call.1} parent=47 // pred_fallthru
          _
      $region48: #{tpu_custom_call.1} parent=5 // pred_fallthru
        _
      %p857 = scmp.le.s32.totalorder 2, %s18
      // Predicated region
      $region53: #{tpu_custom_call.1} parent=5 // pred_check
        %p858 = pneg %p857
      $region54: #{tpu_custom_call.1} parent=5 // pred_check_branch
        %860 = sbr.rel (%p858) target = $region56
      $region55: #{tpu_custom_call.1} parent=5 // pred_region
        %s861 = ssub.s32 %s18, 2
        // Predicated region
        $region57: #{tpu_custom_call.1} parent=55 // pred_check
          %p862 = pneg %p199
        $region58: #{tpu_custom_call.1} parent=55 // pred_check_branch
          %864 = sbr.rel (%p862) target = $region60
        $region59: #{tpu_custom_call.1} parent=55 // pred_region
          %s865 = sand.u32 %s184, 1
          %s866 = scalar_lea.sflag [#allocation4], %s865
          %s867 = sand.u32 %s184, 1
          %s868 = smul.addr %s867, 4
          %s869 = scalar_lea.vmem [#allocation3], %s868
          %871 = dma.done %s866, 64
        $region60: #{tpu_custom_call.1} parent=55 // pred_fallthru
          _
      $region56: #{tpu_custom_call.1} parent=5 // pred_fallthru
        _
    $region6: #{tpu_custom_call.1} parent=1 // loop_footer
      %s22 = sadd.s32 1, %s18
    $region7: #{tpu_custom_call.1} parent=1 // loop_footer_branch
      %17 = sbr.rel target = $region3
    $region8: #{tpu_custom_call.1} parent=1 // loop_exit
      _
    %872 = vsyncpa [#allocation4], 1
    %s873 = scalar_lea.sflag [#allocation4], 1
    %874 = vsyncpa %s873, 1

</llo_original>
